<compile_context>
chip_gen: v7x
topology: tpu7x:2x2x1
jax: 0.10.0
libtpu: 0.0.40
codegen_flags: <defaults>
</compile_context>

<pallas_src>
import math

import jax
import jax.numpy as jnp
from jax.experimental import pallas as pl
from jax.experimental.pallas import tpu as pltpu

H_IN = 768        # BERT pooled feature size
H_MID = 128       # text_class_1 output size
N_CLS = 5         # text_class_2 output size
N_CLS_PAD = 128   # lane-padded logits width (sliced back to 5 outside the kernel)
TB_MAX = 1024     # max batch tile: ~4 MiB of double-buffered bf16 tiles


def _round_up(x, m):
    return (x + m - 1) // m * m


def _head_kernel(x_ref, w1_ref, b1_ref, w2_ref, b2_ref, logits_ref):
    # x: [TB, 768] (bf16 preferred)   w1: [768, 128] bf16   b1: [1, 128] f32
    # w2: [128, 128] bf16 (zero-padded 5->128)              b2: [1, 128] f32
    x = x_ref[...].astype(jnp.bfloat16)  # no-op when the producer already emits bf16

    # text_class_1: h = x @ W1 + b1   (bf16 MXU operands, f32 accumulation)
    h = jnp.dot(x, w1_ref[...], preferred_element_type=jnp.float32) + b1_ref[...]

    # exact (erf-based) GELU, matching torch.nn.GELU() default
    g = 0.5 * h * (1.0 + jax.lax.erf(h * (1.0 / math.sqrt(2.0))))

    # text_class_2: logits = g @ W2 + b2 ; stored bf16 to halve writeback bytes
    logits = (
        jnp.dot(g.astype(jnp.bfloat16), w2_ref[...], preferred_element_type=jnp.float32)
        + b2_ref[...]
    )
    logits_ref[...] = logits.astype(logits_ref.dtype)


def prepare_head_params(w1, b1, w2, b2):
    """One-time parameter prep, hoisted out of the per-call path.

    Weights use the [in_features, out_features] layout (transpose of the
    PyTorch nn.Linear [out, in] convention) so the kernel computes x @ W + b.
    The 5-wide classifier is zero-padded to 128 lanes for a lane-dense store
    and the matmul weights are pre-cast to bf16 for the MXU.
    """
    w1_bf = w1.astype(jnp.bfloat16)
    b1_2d = b1.reshape(1, H_MID).astype(jnp.float32)
    w2_pad = (
        jnp.zeros((H_MID, N_CLS_PAD), jnp.bfloat16)
        .at[:, :N_CLS]
        .set(w2.astype(jnp.bfloat16))
    )
    b2_pad = (
        jnp.zeros((1, N_CLS_PAD), jnp.float32)
        .at[:, :N_CLS]
        .set(b2.reshape(1, -1).astype(jnp.float32))
    )
    return w1_bf, b1_2d, w2_pad, b2_pad


def text_encoder_head(pooled, w1_bf, b1_2d, w2_pad, b2_pad):
    """pooled: [B, 768] (bf16 preferred, f32 accepted).

    Returns (text_output [B, 5] float32, text_feature [B, 768] == pooled).
    """
    B = pooled.shape[0]

    # Batch tile: cap at TB_MAX, but aim for >= 2 grid steps so both v7x
    # TensorCores get work on the "parallel" batch axis.  No input padding:
    # the grid uses cdiv and Pallas masks the ragged last block's writeback.
    tb = min(TB_MAX, max(8, _round_up(pl.cdiv(B, 2), 8)))
    grid = (pl.cdiv(B, tb),)

    in_bytes = jnp.dtype(pooled.dtype).itemsize
    cost = pl.CostEstimate(
        flops=2 * B * (H_IN * H_MID + H_MID * N_CLS_PAD),
        transcendentals=B * H_MID,
        bytes_accessed=(
            B * H_IN * in_bytes                      # pooled in
            + B * N_CLS_PAD * 2                      # bf16 logits out
            + w1_bf.size * 2 + w2_pad.size * 2       # bf16 weights
            + b1_2d.size * 4 + b2_pad.size * 4       # f32 biases
        ),
    )

    logits_pad = pl.pallas_call(
        _head_kernel,
        out_shape=jax.ShapeDtypeStruct((B, N_CLS_PAD), jnp.bfloat16),
        grid_spec=pltpu.PrefetchScalarGridSpec(
            num_scalar_prefetch=0,
            grid=grid,
            in_specs=[
                pl.BlockSpec((tb, H_IN), lambda i: (i, 0)),          # activations: streamed
                pl.BlockSpec((H_IN, H_MID), lambda i: (0, 0)),       # W1: resident
                pl.BlockSpec((1, H_MID), lambda i: (0, 0)),          # b1: resident
                pl.BlockSpec((H_MID, N_CLS_PAD), lambda i: (0, 0)),  # W2: resident
                pl.BlockSpec((1, N_CLS_PAD), lambda i: (0, 0)),      # b2: resident
            ],
            out_specs=pl.BlockSpec((tb, N_CLS_PAD), lambda i: (i, 0)),
        ),
        compiler_params=pltpu.CompilerParams(
            dimension_semantics=("parallel",),  # megacore split on v7x; no-op v5e/v6e
        ),
        cost_estimate=cost,
    )(pooled, w1_bf, b1_2d, w2_pad, b2_pad)

    # [:B] also discards any garbage rows produced by the ragged last block.
    text_output = logits_pad[:B, :N_CLS].astype(jnp.float32)
    text_feature = pooled  # dropout == identity in eval mode
    return text_output, text_feature


def init_params(key):
    """Deterministic init matching the nn.Linear shapes in __init__ ([in, out] layout)."""
    k1, k2, k3, k4 = jax.random.split(key, 4)
    lim1 = 1.0 / math.sqrt(H_IN)
    lim2 = 1.0 / math.sqrt(H_MID)
    w1 = jax.random.uniform(k1, (H_IN, H_MID), jnp.float32, -lim1, lim1)
    b1 = jax.random.uniform(k2, (H_MID,), jnp.float32, -lim1, lim1)
    w2 = jax.random.uniform(k3, (H_MID, N_CLS), jnp.float32, -lim2, lim2)
    b2 = jax.random.uniform(k4, (N_CLS,), jnp.float32, -lim2, lim2)
    return w1, b1, w2, b2


if __name__ == "__main__":
    key = jax.random.PRNGKey(0)
    k_params, k_pooled = jax.random.split(key)

    # Small demo batch; 12 is deliberately not a multiple of the 8-row tile so the
    # ragged-last-block path (masked writeback, >1 grid step) is exercised.
    B = 12
    # Synthetic stand-in for the BERT pooled output (see TODO(synk) above); the real
    # pooler would hand the feature over in bf16, so the test input is built as bf16.
    pooled = jax.random.normal(k_pooled, (B, H_IN), jnp.float32).astype(jnp.bfloat16)

    w1, b1, w2, b2 = init_params(k_params)
    head_params = prepare_head_params(w1, b1, w2, b2)  # one-time prep, outside call path

    run = jax.jit(text_encoder_head)
    text_output, text_feature = run(pooled, *head_params)
    jax.block_until_ready((text_output, text_feature))

    # References: bf16-operand/f32-accumulate (what the kernel's MXU does) and pure f32.
    x32 = pooled.astype(jnp.float32)

    h_bf = jnp.dot(pooled, w1.astype(jnp.bfloat16),
                   preferred_element_type=jnp.float32) + b1
    g_bf = 0.5 * h_bf * (1.0 + jax.lax.erf(h_bf / math.sqrt(2.0)))
    logits_bf = jnp.dot(g_bf.astype(jnp.bfloat16), w2.astype(jnp.bfloat16),
                        preferred_element_type=jnp.float32) + b2

    h32 = x32 @ w1 + b1
    g32 = 0.5 * h32 * (1.0 + jax.lax.erf(h32 / math.sqrt(2.0)))
    logits32 = g32 @ w2 + b2

    assert text_output.shape == (B, N_CLS)
    assert text_feature.shape == (B, H_IN)
    assert bool(jnp.all(jnp.isfinite(text_output)))
    assert jnp.allclose(text_feature.astype(jnp.float32), x32)
    assert jnp.allclose(text_output, logits_bf, atol=2e-2, rtol=2e-2)
    assert jnp.allclose(text_output, logits32, atol=8e-2, rtol=8e-2)

    print("KERNEL_OK")
</pallas_src>

<mosaic_0001>
module attributes {stable_mosaic.version = 11 : i64} {
  func.func @_head_kernel(%arg0: i32, %arg1: memref<8x768xbf16, #tpu.memory_space<vmem>>, %arg2: memref<768x128xbf16, #tpu.memory_space<vmem>>, %arg3: memref<1x128xf32, #tpu.memory_space<vmem>>, %arg4: memref<128x128xbf16, #tpu.memory_space<vmem>>, %arg5: memref<1x128xf32, #tpu.memory_space<vmem>>, %arg6: memref<8x128xbf16, #tpu.memory_space<vmem>>) attributes {dimension_semantics = [#tpu.dimension_semantics<parallel>], iteration_bounds = array<i64: 2>, scalar_prefetch = 0 : i64, scratch_operands = 0 : i64, tpu.core_type = #tpu.core_type<tc>, window_params = [{transform_indices = @transform_0, window_bounds = array<i64: 8, 768>}, {pipeline_mode = #tpu.pipeline_mode<synchronous>, transform_indices = @transform_1, window_bounds = array<i64: 768, 128>}, {pipeline_mode = #tpu.pipeline_mode<synchronous>, transform_indices = @transform_2, window_bounds = array<i64: 1, 128>}, {pipeline_mode = #tpu.pipeline_mode<synchronous>, transform_indices = @transform_3, window_bounds = array<i64: 128, 128>}, {pipeline_mode = #tpu.pipeline_mode<synchronous>, transform_indices = @transform_4, window_bounds = array<i64: 1, 128>}, {transform_indices = @transform_5, window_bounds = array<i64: 8, 128>}]} {
    %c0 = arith.constant 0 : index
    %c0_0 = arith.constant 0 : index
    %0 = vector.load %arg1[%c0, %c0_0] : memref<8x768xbf16, #tpu.memory_space<vmem>>, vector<8x768xbf16>
    %c0_1 = arith.constant 0 : index
    %c0_2 = arith.constant 0 : index
    %1 = vector.load %arg2[%c0_1, %c0_2] : memref<768x128xbf16, #tpu.memory_space<vmem>>, vector<768x128xbf16>
    %cst = arith.constant dense<0.000000e+00> : vector<8x128xf32>
    %2 = tpu.matmul %0, %1, %cst {dimension_numbers = #tpu.dot_dimension_numbers<[1], [0], [0], [1], [0, 0, 1, 1], [], []>} : vector<8x768xbf16>, vector<768x128xbf16>, vector<8x128xf32> -> vector<8x128xf32>
    %c0_3 = arith.constant 0 : index
    %c0_4 = arith.constant 0 : index
    %3 = vector.load %arg3[%c0_3, %c0_4] : memref<1x128xf32, #tpu.memory_space<vmem>>, vector<1x128xf32>
    %4 = vector.broadcast %3 : vector<1x128xf32> to vector<8x128xf32>
    %5 = arith.addf %2, %4 : vector<8x128xf32>
    %cst_5 = arith.constant 5.000000e-01 : f32
    %6 = vector.broadcast %cst_5 : f32 to vector<8x128xf32>
    %7 = arith.mulf %6, %5 : vector<8x128xf32>
    %cst_6 = arith.constant 0.707106769 : f32
    %8 = vector.broadcast %cst_6 : f32 to vector<8x128xf32>
    %9 = arith.mulf %5, %8 : vector<8x128xf32>
    %10 = math.erf %9 : vector<8x128xf32>
    %cst_7 = arith.constant 1.000000e+00 : f32
    %11 = vector.broadcast %cst_7 : f32 to vector<8x128xf32>
    %12 = arith.addf %11, %10 : vector<8x128xf32>
    %13 = arith.mulf %7, %12 : vector<8x128xf32>
    %14 = arith.truncf %13 : vector<8x128xf32> to vector<8x128xbf16>
    %c0_8 = arith.constant 0 : index
    %c0_9 = arith.constant 0 : index
    %15 = vector.load %arg4[%c0_8, %c0_9] : memref<128x128xbf16, #tpu.memory_space<vmem>>, vector<128x128xbf16>
    %cst_10 = arith.constant dense<0.000000e+00> : vector<8x128xf32>
    %16 = tpu.matmul %14, %15, %cst_10 {dimension_numbers = #tpu.dot_dimension_numbers<[1], [0], [0], [1], [0, 0, 1, 1], [], []>} : vector<8x128xbf16>, vector<128x128xbf16>, vector<8x128xf32> -> vector<8x128xf32>
    %c0_11 = arith.constant 0 : index
    %c0_12 = arith.constant 0 : index
    %17 = vector.load %arg5[%c0_11, %c0_12] : memref<1x128xf32, #tpu.memory_space<vmem>>, vector<1x128xf32>
    %18 = vector.broadcast %17 : vector<1x128xf32> to vector<8x128xf32>
    %19 = arith.addf %16, %18 : vector<8x128xf32>
    %20 = arith.truncf %19 : vector<8x128xf32> to vector<8x128xbf16>
    %c0_13 = arith.constant 0 : index
    %c0_14 = arith.constant 0 : index
    %21 = vector.load %arg6[%c0_13, %c0_14] : memref<8x128xbf16, #tpu.memory_space<vmem>>, vector<8x128xbf16>
    tpu.vector_store %arg6[%c0_13, %c0_14], %20 {strides = array<i32>} : memref<8x128xbf16, #tpu.memory_space<vmem>>, vector<8x128xbf16>,
    return
  }
  func.func @transform_0(%arg0: i32) -> (i32, i32) {
    %c0_i32 = arith.constant 0 : i32
    %c0_i32_0 = arith.constant 0 : i32
    return %arg0, %c0_i32 : i32, i32
  }
  func.func @transform_1(%arg0: i32) -> (i32, i32) {
    %c0_i32 = arith.constant 0 : i32
    %c0_i32_0 = arith.constant 0 : i32
    %c0_i32_1 = arith.constant 0 : i32
    return %c0_i32, %c0_i32_0 : i32, i32
  }
  func.func @transform_2(%arg0: i32) -> (i32, i32) {
    %c0_i32 = arith.constant 0 : i32
    %c0_i32_0 = arith.constant 0 : i32
    %c0_i32_1 = arith.constant 0 : i32
    return %c0_i32, %c0_i32_0 : i32, i32
  }
  func.func @transform_3(%arg0: i32) -> (i32, i32) {
    %c0_i32 = arith.constant 0 : i32
    %c0_i32_0 = arith.constant 0 : i32
    %c0_i32_1 = arith.constant 0 : i32
    return %c0_i32, %c0_i32_0 : i32, i32
  }
  func.func @transform_4(%arg0: i32) -> (i32, i32) {
    %c0_i32 = arith.constant 0 : i32
    %c0_i32_0 = arith.constant 0 : i32
    %c0_i32_1 = arith.constant 0 : i32
    return %c0_i32, %c0_i32_0 : i32, i32
  }
  func.func @transform_5(%arg0: i32) -> (i32, i32) {
    %c0_i32 = arith.constant 0 : i32
    %c0_i32_0 = arith.constant 0 : i32
    return %arg0, %c0_i32 : i32, i32
  }
}

</mosaic_0001>

<llo_original>
// kernel: text_encoder_head.1
$region0: #{text_encoder_head.1}
  #allocation0 [shape = 'u32[]', space=smem, size = 0x4, offset = 0x4, fixed_abs, tag = 'smem constant byte address 0x4 - core index']
  #allocation1 [shape = 'u32[144,128]{1,0:T(1,128)}', space=vmem, size = 0x12000, scoped, tag = 'internal scratch']
  %s0 = inlined_call_operand.hbm [shape: bf16[12,768], index: 0, kind: input, shape index: {}]
  %s1 = inlined_call_operand.hbm [shape: bf16[768,128], index: 1, kind: input, shape index: {}]
  %s2 = inlined_call_operand.vmem [shape: f32[1,128], index: 2, kind: input, shape index: {}]
  %s3 = inlined_call_operand.hbm [shape: bf16[128,128], index: 3, kind: input, shape index: {}]
  %s4 = inlined_call_operand.vmem [shape: f32[1,128], index: 4, kind: input, shape index: {}]
  %s5 = inlined_call_operand.vmem [shape: bf16[12,128], index: 5, kind: output, shape index: {}]
  %s6 = sld [smem:[#allocation0]]
  $region65: #{text_encoder_head.1} parent=0
    _
  %s8 = ssub.s32 1, %s6
  %s9 = scalar_select 0, %s8, %s6
  $region1: #{text_encoder_head.1} parent=0
    #allocation2 [shape = 'u8[24576]{0}', space=vmem, size = 0x6000, scoped, tag = 'input window, operand 0']
    #allocation3 [shape = 's32[2]{0}', space=sflag, size = 0x8, scoped, tag = 'scoped memory for text_encoder_head.1']
    #allocation4 [shape = 'u8[196608]{0}', space=vmem, size = 0x30000, scoped, tag = 'input window, operand 1, single buffered']
    #allocation5 [shape = 's32[1]{0}', space=sflag, size = 0x4, scoped, tag = 'scoped memory for text_encoder_head.1']
    #allocation6 [shape = 'u8[32768]{0}', space=vmem, size = 0x8000, scoped, tag = 'input window, operand 3, single buffered']
    %10 = vsyncpa [#allocation3], 0
    %s11 = scalar_lea.sflag [#allocation3], 1
    %12 = vsyncpa %s11, 0
    %13 = vsyncpa [#allocation5], 0
    loop: start=0, step=1, limit=4
    $region2: #{text_encoder_head.1} parent=1 // loop_pre_header
      _
    $region3: #{text_encoder_head.1} parent=1 // loop_header
      %s15 = sphi 0, %s19
      %p16 = scmp.ge.s32.totalorder %s15, 4
      %s25 = sphi 0, %s27
      %s28 = sphi 0, %s25
      %s29 = sphi 0, %s28
      %s45 = sphi 0, %s29
      %s49 = sphi 0, %s49
      %s51 = sphi 0, %s49
      %s52 = sphi 0, %s51
      %s66 = sphi 0, %s52
      %s70 = sphi 0, %s70
      %s72 = sphi 0, %s70
      %s73 = sphi 0, %s72
      %s87 = sphi 0, %s73
      %s91 = sphi 0, %s91
      %s93 = sphi 0, %s91
      %s94 = sphi 0, %s93
      %s108 = sphi 0, %s94
      %s112 = sphi 0, %s112
      %s114 = sphi 0, %s112
      %s115 = sphi 0, %s114
      %s129 = sphi 0, %s115
      %s135 = sphi 0, %s137
      %s138 = sphi 0, %s135
      %s139 = sphi 0, %s138
      %s155 = sphi 0, %s139
    $region4: #{text_encoder_head.1} parent=1 // loop_header_branch
      %18 = sbr.rel (%p16) target = $region8
    $region5: #{text_encoder_head.1} parent=1 // loop_body
      %s20 = ssub.s32 %s15, 1
      %s21 = ssub.s32 %s15, 2
      %s22 = sadd.s32 %s15, 1
      %s23 = ssub.s32 %s15, %s22
      %p24 = scmp.eq.s32.totalorder %s23, 0
      %s26 = sadd.s32 %s25, 1
      %s27 = scalar_select %p24, %s25, %s26
      %p30 = pneg %p24
      %p31 = scmp.eq.s32.totalorder %s15, 1
      %p32 = por %p30, %p31
      %p33 = scmp.ne.s32.totalorder %s25, %s28
      %p34 = scmp.eq.s32.totalorder %s15, 0
      %p35 = por %p33, %p34
      %p36 = scmp.ne.s32.totalorder %s25, %s28
      %p37 = scmp.eq.s32.totalorder %s20, 1
      %p38 = por %p36, %p37
      %p39 = scmp.ne.s32.totalorder %s28, %s29
      %p40 = scmp.eq.s32.totalorder %s20, 0
      %p41 = por %p39, %p40
      %p42 = scmp.ne.s32.totalorder %s28, %s29
      %p43 = scmp.eq.s32.totalorder %s21, 1
      %p44 = por %p42, %p43
      %p46 = scmp.ne.s32.totalorder %s29, %s45
      %p47 = scmp.eq.s32.totalorder %s21, 0
      %p48 = por %p46, %p47
      %s50 = sadd.s32 %s49, 1
      %p53 = scmp.eq.s32.totalorder %s15, 1
      %p54 = scmp.ne.s32.totalorder %s49, %s51
      %p55 = scmp.eq.s32.totalorder %s15, 0
      %p56 = por %p54, %p55
      %p57 = scmp.ne.s32.totalorder %s49, %s51
      %p58 = scmp.eq.s32.totalorder %s20, 1
      %p59 = por %p57, %p58
      %p60 = scmp.ne.s32.totalorder %s51, %s52
      %p61 = scmp.eq.s32.totalorder %s20, 0
      %p62 = por %p60, %p61
      %p63 = scmp.ne.s32.totalorder %s51, %s52
      %p64 = scmp.eq.s32.totalorder %s21, 1
      %p65 = por %p63, %p64
      %p67 = scmp.ne.s32.totalorder %s52, %s66
      %p68 = scmp.eq.s32.totalorder %s21, 0
      %p69 = por %p67, %p68
      %s71 = sadd.s32 %s70, 1
      %p74 = scmp.eq.s32.totalorder %s15, 1
      %p75 = scmp.ne.s32.totalorder %s70, %s72
      %p76 = scmp.eq.s32.totalorder %s15, 0
      %p77 = por %p75, %p76
      %p78 = scmp.ne.s32.totalorder %s70, %s72
      %p79 = scmp.eq.s32.totalorder %s20, 1
      %p80 = por %p78, %p79
      %p81 = scmp.ne.s32.totalorder %s72, %s73
      %p82 = scmp.eq.s32.totalorder %s20, 0
      %p83 = por %p81, %p82
      %p84 = scmp.ne.s32.totalorder %s72, %s73
      %p85 = scmp.eq.s32.totalorder %s21, 1
      %p86 = por %p84, %p85
      %p88 = scmp.ne.s32.totalorder %s73, %s87
      %p89 = scmp.eq.s32.totalorder %s21, 0
      %p90 = por %p88, %p89
      %s92 = sadd.s32 %s91, 1
      %p95 = scmp.eq.s32.totalorder %s15, 1
      %p96 = scmp.ne.s32.totalorder %s91, %s93
      %p97 = scmp.eq.s32.totalorder %s15, 0
      %p98 = por %p96, %p97
      %p99 = scmp.ne.s32.totalorder %s91, %s93
      %p100 = scmp.eq.s32.totalorder %s20, 1
      %p101 = por %p99, %p100
      %p102 = scmp.ne.s32.totalorder %s93, %s94
      %p103 = scmp.eq.s32.totalorder %s20, 0
      %p104 = por %p102, %p103
      %p105 = scmp.ne.s32.totalorder %s93, %s94
      %p106 = scmp.eq.s32.totalorder %s21, 1
      %p107 = por %p105, %p106
      %p109 = scmp.ne.s32.totalorder %s94, %s108
      %p110 = scmp.eq.s32.totalorder %s21, 0
      %p111 = por %p109, %p110
      %s113 = sadd.s32 %s112, 1
      %p116 = scmp.eq.s32.totalorder %s15, 1
      %p117 = scmp.ne.s32.totalorder %s112, %s114
      %p118 = scmp.eq.s32.totalorder %s15, 0
      %p119 = por %p117, %p118
      %p120 = scmp.ne.s32.totalorder %s112, %s114
      %p121 = scmp.eq.s32.totalorder %s20, 1
      %p122 = por %p120, %p121
      %p123 = scmp.ne.s32.totalorder %s114, %s115
      %p124 = scmp.eq.s32.totalorder %s20, 0
      %p125 = por %p123, %p124
      %p126 = scmp.ne.s32.totalorder %s114, %s115
      %p127 = scmp.eq.s32.totalorder %s21, 1
      %p128 = por %p126, %p127
      %p130 = scmp.ne.s32.totalorder %s115, %s129
      %p131 = scmp.eq.s32.totalorder %s21, 0
      %p132 = por %p130, %p131
      %s133 = ssub.s32 %s15, %s22
      %p134 = scmp.eq.s32.totalorder %s133, 0
      %s136 = sadd.s32 %s135, 1
      %s137 = scalar_select %p134, %s135, %s136
      %p140 = pneg %p134
      %p141 = scmp.eq.s32.totalorder %s15, 1
      %p142 = por %p140, %p141
      %p143 = scmp.ne.s32.totalorder %s135, %s138
      %p144 = scmp.eq.s32.totalorder %s15, 0
      %p145 = por %p143, %p144
      %p146 = scmp.ne.s32.totalorder %s135, %s138
      %p147 = scmp.eq.s32.totalorder %s20, 1
      %p148 = por %p146, %p147
      %p149 = scmp.ne.s32.totalorder %s138, %s139
      %p150 = scmp.eq.s32.totalorder %s20, 0
      %p151 = por %p149, %p150
      %p152 = scmp.ne.s32.totalorder %s138, %s139
      %p153 = scmp.eq.s32.totalorder %s21, 1
      %p154 = por %p152, %p153
      %p156 = scmp.ne.s32.totalorder %s139, %s155
      %p157 = scmp.eq.s32.totalorder %s21, 0
      %p158 = por %p156, %p157
      %p159 = scmp.le.s32.totalorder 1, %s15
      %p160 = scmp.lt.s32.totalorder %s15, 3
      %p161 = pnand %p159, %p160
      %p162 = pneg %p161
      // Predicated region
      $region9: #{text_encoder_head.1} parent=5 // pred_check
        _
      $region10: #{text_encoder_head.1} parent=5 // pred_check_branch
        %164 = sbr.rel (%p161) target = $region12
      $region11: #{text_encoder_head.1} parent=5 // pred_region
        %s165 = ssub.s32 %s15, 1
        // Predicated region
        $region13: #{text_encoder_head.1} parent=11 // pred_check
          %p166 = pneg %p62
        $region14: #{text_encoder_head.1} parent=11 // pred_check_branch
          %168 = sbr.rel (%p166) target = $region16
        $region15: #{text_encoder_head.1} parent=11 // pred_region
          %s170 = ssub.s32 6144, 6144
          %171 = vsyncadd [#allocation5], %s170
          %s172 = sshll.u32 [#allocation4], 4
          %s173 = int_to_ptr.vmem [resolvable:$true] %s172
          %178 = dma.hbm_to_vmem [thread:$0]  %s1, 6144, %s173, [#allocation5], 64, 64, 4
        $region16: #{text_encoder_head.1} parent=11 // pred_fallthru
          _
        // Predicated region
        $region17: #{text_encoder_head.1} parent=11 // pred_check
          %p179 = pneg %p83
        $region18: #{text_encoder_head.1} parent=11 // pred_check_branch
          %181 = sbr.rel (%p179) target = $region20
        $region19: #{text_encoder_head.1} parent=11 // pred_region
          _
        $region20: #{text_encoder_head.1} parent=11 // pred_fallthru
          _
        // Predicated region
        $region21: #{text_encoder_head.1} parent=11 // pred_check
          %p182 = pneg %p104
        $region22: #{text_encoder_head.1} parent=11 // pred_check_branch
          %184 = sbr.rel (%p182) target = $region24
        $region23: #{text_encoder_head.1} parent=11 // pred_region
          %s186 = ssub.s32 1024, 1024
          %187 = vsyncadd [#allocation5], %s186
          %s188 = sshll.u32 [#allocation6], 4
          %s189 = int_to_ptr.vmem [resolvable:$true] %s188
          %194 = dma.hbm_to_vmem [thread:$0]  %s3, 1024, %s189, [#allocation5], 64, 64, 4
        $region24: #{text_encoder_head.1} parent=11 // pred_fallthru
          _
        // Predicated region
        $region25: #{text_encoder_head.1} parent=11 // pred_check
          %p195 = pneg %p125
        $region26: #{text_encoder_head.1} parent=11 // pred_check_branch
          %197 = sbr.rel (%p195) target = $region28
        $region27: #{text_encoder_head.1} parent=11 // pred_region
          _
        $region28: #{text_encoder_head.1} parent=11 // pred_fallthru
          _
      $region12: #{text_encoder_head.1} parent=5 // pred_fallthru
        _
      %p198 = scmp.lt.s32.totalorder %s15, 2
      // Predicated region
      $region29: #{text_encoder_head.1} parent=5 // pred_check
        %p199 = pneg %p198
      $region30: #{text_encoder_head.1} parent=5 // pred_check_branch
        %201 = sbr.rel (%p199) target = $region32
      $region31: #{text_encoder_head.1} parent=5 // pred_region
        // Predicated region
        $region33: #{text_encoder_head.1} parent=31 // pred_check
          %p202 = pneg %p35
        $region34: #{text_encoder_head.1} parent=31 // pred_check_branch
          %204 = sbr.rel (%p202) target = $region36
        $region35: #{text_encoder_head.1} parent=31 // pred_region
          %s205 = sand.u32 %s25, 1
          %s206 = scalar_lea.sflag [#allocation3], %s205
          %s207 = sand.u32 %s25, 1
          %s208 = smul.addr %s207, 24
          %s209 = scalar_lea.vmem [#allocation2], %s208
          %s211 = ssub.s32 384, 384
          %212 = vsyncadd %s206, %s211
          %s213 = smul.addr %s15, 6
          %s214 = smul.addr %s213, 64
          %s215 = scalar_lea.hbm %s0, %s214
          %s217 = sshll.u32 %s209, 4
          %s218 = int_to_ptr.vmem [resolvable:$true] %s217
          %220 = dma.hbm_to_vmem [thread:$0]  %s215, 384, %s218, %s206
        $region36: #{text_encoder_head.1} parent=31 // pred_fallthru
          _
      $region32: #{text_encoder_head.1} parent=5 // pred_fallthru
        _
      %p221 = scmp.le.s32.totalorder 1, %s15
      %p222 = scmp.lt.s32.totalorder %s15, 3
      %p223 = pnand %p221, %p222
      %p224 = pneg %p223
      // Predicated region
      $region37: #{text_encoder_head.1} parent=5 // pred_check
        _
      $region38: #{text_encoder_head.1} parent=5 // pred_check_branch
        %226 = sbr.rel (%p223) target = $region40
      $region39: #{text_encoder_head.1} parent=5 // pred_region
        %s227 = ssub.s32 %s15, 1
        %s228 = sand.u32 %s28, 1
        %s229 = scalar_lea.sflag [#allocation3], %s228
        %s230 = sand.u32 %s28, 1
        %s231 = smul.addr %s230, 24
        %s232 = scalar_lea.vmem [#allocation2], %s231
        // Predicated region
        $region41: #{text_encoder_head.1} parent=39 // pred_check
          %p233 = pneg %p41
        $region42: #{text_encoder_head.1} parent=39 // pred_check_branch
          %235 = sbr.rel (%p233) target = $region44
        $region43: #{text_encoder_head.1} parent=39 // pred_region
          %236 = dma.done %s229, 384
        $region44: #{text_encoder_head.1} parent=39 // pred_fallthru
          _
        // Predicated region
        $region45: #{text_encoder_head.1} parent=39 // pred_check
          %p237 = pneg %p62
        $region46: #{text_encoder_head.1} parent=39 // pred_check_branch
          %239 = sbr.rel (%p237) target = $region48
        $region47: #{text_encoder_head.1} parent=39 // pred_region
          %240 = dma.done [#allocation5], 6144
        $region48: #{text_encoder_head.1} parent=39 // pred_fallthru
          _
        // Predicated region
        $region49: #{text_encoder_head.1} parent=39 // pred_check
          %p241 = pneg %p104
        $region50: #{text_encoder_head.1} parent=39 // pred_check_branch
          %243 = sbr.rel (%p241) target = $region52
        $region51: #{text_encoder_head.1} parent=39 // pred_region
          %244 = dma.done [#allocation5], 1024
        $region52: #{text_encoder_head.1} parent=39 // pred_fallthru
          _
        %s245 = sand.u32 %s28, 1
        %s246 = scalar_lea.sflag [#allocation3], %s245
        %s247 = sand.u32 %s28, 1
        %s248 = smul.addr %s247, 24
        %s249 = scalar_lea.vmem [#allocation2], %s248
        %p250 = pneg %p41
        %p251 = pneg %p38
        %p252 = pneg %p62
        %p253 = pneg %p59
        %p254 = pneg %p83
        %p255 = pneg %p80
        %p256 = pneg %p104
        %p257 = pneg %p101
        %p258 = pneg %p125
        %p259 = pneg %p122
        %p260 = pneg %p151
        %p261 = pneg %p148
        %p262 = scmp.lt.s32.totalorder %s20, 1
        %s263 = scalar_select %p262, %s20, 1
        %s264 = smul.addr %s263, 4
        %s265 = scalar_lea.vmem %s5, %s264
        %p266 = scmp.lt.s32.totalorder %s20, 1
        %s267 = scalar_select %p266, %s20, 1
        %s268 = smul.addr %s267, 4
        %s269 = scalar_lea.vmem %s5, %s268
        %v271 = vld [vmem:[%s232] sm:$0xff]
        %v272 = vld [vmem:[%s232 + $0x8] sm:$0xff]
        %v273 = vld [vmem:[%s232 + $0x10] sm:$0xff]
        %v274 = vld [vmem:[#allocation4] sm:$0xf]
        %v275 = vld [vmem:[#allocation4 + $0x4] sm:$0xf]
        %v276 = vld [vmem:[#allocation4 + $0x8] sm:$0xf]
        %v277 = vld [vmem:[#allocation4 + $0xc] sm:$0xf]
        %v278 = vld [vmem:[#allocation4 + $0x10] sm:$0xf]
        %v279 = vld [vmem:[#allocation4 + $0x14] sm:$0xf]
        %v280 = vld [vmem:[#allocation4 + $0x18] sm:$0xf]
        %v281 = vld [vmem:[#allocation4 + $0x1c] sm:$0xf]
        %v282 = vld [vmem:[#allocation4 + $0x20] sm:$0xf]
        %v283 = vld [vmem:[#allocation4 + $0x24] sm:$0xf]
        %v284 = vld [vmem:[#allocation4 + $0x28] sm:$0xf]
        %v285 = vld [vmem:[#allocation4 + $0x2c] sm:$0xf]
        %v286 = vld [vmem:[#allocation4 + $0x30] sm:$0xf]
        %v287 = vld [vmem:[#allocation4 + $0x34] sm:$0xf]
        %v288 = vld [vmem:[#allocation4 + $0x38] sm:$0xf]
        %v289 = vld [vmem:[#allocation4 + $0x3c] sm:$0xf]
        %v290 = vld [vmem:[#allocation4 + $0x40] sm:$0xf]
        %v291 = vld [vmem:[#allocation4 + $0x44] sm:$0xf]
        %v292 = vld [vmem:[#allocation4 + $0x48] sm:$0xf]
        %v293 = vld [vmem:[#allocation4 + $0x4c] sm:$0xf]
        %v294 = vld [vmem:[#allocation4 + $0x50] sm:$0xf]
        %v295 = vld [vmem:[#allocation4 + $0x54] sm:$0xf]
        %v296 = vld [vmem:[#allocation4 + $0x58] sm:$0xf]
        %v297 = vld [vmem:[#allocation4 + $0x5c] sm:$0xf]
        %v298 = vld [vmem:[#allocation4 + $0x60] sm:$0xf]
        %v299 = vld [vmem:[#allocation4 + $0x64] sm:$0xf]
        %v300 = vld [vmem:[#allocation4 + $0x68] sm:$0xf]
        %v301 = vld [vmem:[#allocation4 + $0x6c] sm:$0xf]
        %v302 = vld [vmem:[#allocation4 + $0x70] sm:$0xf]
        %v303 = vld [vmem:[#allocation4 + $0x74] sm:$0xf]
        %v304 = vld [vmem:[#allocation4 + $0x78] sm:$0xf]
        %v305 = vld [vmem:[#allocation4 + $0x7c] sm:$0xf]
        %v306 = vld [vmem:[#allocation4 + $0x80] sm:$0xf]
        %v307 = vld [vmem:[#allocation4 + $0x84] sm:$0xf]
        %v308 = vld [vmem:[#allocation4 + $0x88] sm:$0xf]
        %v309 = vld [vmem:[#allocation4 + $0x8c] sm:$0xf]
        %v310 = vld [vmem:[#allocation4 + $0x90] sm:$0xf]
        %v311 = vld [vmem:[#allocation4 + $0x94] sm:$0xf]
        %v312 = vld [vmem:[#allocation4 + $0x98] sm:$0xf]
        %v313 = vld [vmem:[#allocation4 + $0x9c] sm:$0xf]
        %v314 = vld [vmem:[#allocation4 + $0xa0] sm:$0xf]
        %v315 = vld [vmem:[#allocation4 + $0xa4] sm:$0xf]
        %v316 = vld [vmem:[#allocation4 + $0xa8] sm:$0xf]
        %v317 = vld [vmem:[#allocation4 + $0xac] sm:$0xf]
        %v318 = vld [vmem:[#allocation4 + $0xb0] sm:$0xf]
        %v319 = vld [vmem:[#allocation4 + $0xb4] sm:$0xf]
        %v320 = vld [vmem:[#allocation4 + $0xb8] sm:$0xf]
        %v321 = vld [vmem:[#allocation4 + $0xbc] sm:$0xf]
        %v322 = vld [vmem:[#allocation4 + $0xc0] sm:$0xf]
        %v323 = vld [vmem:[#allocation4 + $0xc4] sm:$0xf]
        %v324 = vld [vmem:[#allocation4 + $0xc8] sm:$0xf]
        %v325 = vld [vmem:[#allocation4 + $0xcc] sm:$0xf]
        %v326 = vld [vmem:[#allocation4 + $0xd0] sm:$0xf]
        %v327 = vld [vmem:[#allocation4 + $0xd4] sm:$0xf]
        %v328 = vld [vmem:[#allocation4 + $0xd8] sm:$0xf]
        %v329 = vld [vmem:[#allocation4 + $0xdc] sm:$0xf]
        %v330 = vld [vmem:[#allocation4 + $0xe0] sm:$0xf]
        %v331 = vld [vmem:[#allocation4 + $0xe4] sm:$0xf]
        %v332 = vld [vmem:[#allocation4 + $0xe8] sm:$0xf]
        %v333 = vld [vmem:[#allocation4 + $0xec] sm:$0xf]
        %v334 = vld [vmem:[#allocation4 + $0xf0] sm:$0xf]
        %v335 = vld [vmem:[#allocation4 + $0xf4] sm:$0xf]
        %v336 = vld [vmem:[#allocation4 + $0xf8] sm:$0xf]
        %v337 = vld [vmem:[#allocation4 + $0xfc] sm:$0xf]
        %v338 = vld [vmem:[#allocation4 + $0x100] sm:$0xf]
        %v339 = vld [vmem:[#allocation4 + $0x104] sm:$0xf]
        %v340 = vld [vmem:[#allocation4 + $0x108] sm:$0xf]
        %v341 = vld [vmem:[#allocation4 + $0x10c] sm:$0xf]
        %v342 = vld [vmem:[#allocation4 + $0x110] sm:$0xf]
        %v343 = vld [vmem:[#allocation4 + $0x114] sm:$0xf]
        %v344 = vld [vmem:[#allocation4 + $0x118] sm:$0xf]
        %v345 = vld [vmem:[#allocation4 + $0x11c] sm:$0xf]
        %v346 = vld [vmem:[#allocation4 + $0x120] sm:$0xf]
        %v347 = vld [vmem:[#allocation4 + $0x124] sm:$0xf]
        %v348 = vld [vmem:[#allocation4 + $0x128] sm:$0xf]
        %v349 = vld [vmem:[#allocation4 + $0x12c] sm:$0xf]
        %v350 = vld [vmem:[#allocation4 + $0x130] sm:$0xf]
        %v351 = vld [vmem:[#allocation4 + $0x134] sm:$0xf]
        %v352 = vld [vmem:[#allocation4 + $0x138] sm:$0xf]
        %v353 = vld [vmem:[#allocation4 + $0x13c] sm:$0xf]
        %v354 = vld [vmem:[#allocation4 + $0x140] sm:$0xf]
        %v355 = vld [vmem:[#allocation4 + $0x144] sm:$0xf]
        %v356 = vld [vmem:[#allocation4 + $0x148] sm:$0xf]
        %v357 = vld [vmem:[#allocation4 + $0x14c] sm:$0xf]
        %v358 = vld [vmem:[#allocation4 + $0x150] sm:$0xf]
        %v359 = vld [vmem:[#allocation4 + $0x154] sm:$0xf]
        %v360 = vld [vmem:[#allocation4 + $0x158] sm:$0xf]
        %v361 = vld [vmem:[#allocation4 + $0x15c] sm:$0xf]
        %v362 = vld [vmem:[#allocation4 + $0x160] sm:$0xf]
        %v363 = vld [vmem:[#allocation4 + $0x164] sm:$0xf]
        %v364 = vld [vmem:[#allocation4 + $0x168] sm:$0xf]
        %v365 = vld [vmem:[#allocation4 + $0x16c] sm:$0xf]
        %v366 = vld [vmem:[#allocation4 + $0x170] sm:$0xf]
        %v367 = vld [vmem:[#allocation4 + $0x174] sm:$0xf]
        %v368 = vld [vmem:[#allocation4 + $0x178] sm:$0xf]
        %v369 = vld [vmem:[#allocation4 + $0x17c] sm:$0xf]
        %v370 = vld [vmem:[%s2] sm:$0x1]
        %v372 = vlaneseq
        %v373 = vshrl.u32 %v372, 7
        %v374 = vsub.s32 0, %v373
        %v375 = vrot.slane %v370, %v374
        %v380 = vunpack.c.l.b16 %v271
        %v381 = vunpack.c.h.b16 %v271
        %v382 = vunpack.c.l.b16 %v272
        %v383 = vunpack.c.h.b16 %v272
        %v384 = vunpack.c.l.b16 %v273
        %v385 = vunpack.c.h.b16 %v273
        %v386 = vpack.c.b16 %v380, %v380
        %v387 = vpack.c.b16 %v381, %v381
        %v388 = vpack.c.b16 %v382, %v382
        %v389 = vpack.c.b16 %v383, %v383
        %v390 = vpack.c.b16 %v384, %v384
        %v391 = vpack.c.b16 %v385, %v385
        %v494 = vunpack.c.l.b16 %v274
        %v495 = vunpack.c.l.b16 %v275
        %v496 = vunpack.c.l.b16 %v276
        %v497 = vunpack.c.l.b16 %v277
        %v498 = vunpack.c.l.b16 %v278
        %v499 = vunpack.c.l.b16 %v279
        %v500 = vunpack.c.l.b16 %v280
        %v501 = vunpack.c.l.b16 %v281
        %v502 = vunpack.c.l.b16 %v282
        %v503 = vunpack.c.l.b16 %v283
        %v504 = vunpack.c.l.b16 %v284
        %v505 = vunpack.c.l.b16 %v285
        %v506 = vunpack.c.l.b16 %v286
        %v507 = vunpack.c.l.b16 %v287
        %v508 = vunpack.c.l.b16 %v288
        %v509 = vunpack.c.l.b16 %v289
        %v510 = vunpack.c.l.b16 %v290
        %v511 = vunpack.c.l.b16 %v291
        %v512 = vunpack.c.l.b16 %v292
        %v513 = vunpack.c.l.b16 %v293
        %v514 = vunpack.c.l.b16 %v294
        %v515 = vunpack.c.l.b16 %v295
        %v516 = vunpack.c.l.b16 %v296
        %v517 = vunpack.c.l.b16 %v297
        %v518 = vunpack.c.l.b16 %v298
        %v519 = vunpack.c.l.b16 %v299
        %v520 = vunpack.c.l.b16 %v300
        %v521 = vunpack.c.l.b16 %v301
        %v522 = vunpack.c.l.b16 %v302
        %v523 = vunpack.c.l.b16 %v303
        %v524 = vunpack.c.l.b16 %v304
        %v525 = vunpack.c.l.b16 %v305
        %v526 = vunpack.c.l.b16 %v306
        %v527 = vunpack.c.l.b16 %v307
        %v528 = vunpack.c.l.b16 %v308
        %v529 = vunpack.c.l.b16 %v309
        %v530 = vunpack.c.l.b16 %v310
        %v531 = vunpack.c.l.b16 %v311
        %v532 = vunpack.c.l.b16 %v312
        %v533 = vunpack.c.l.b16 %v313
        %v534 = vunpack.c.l.b16 %v314
        %v535 = vunpack.c.l.b16 %v315
        %v536 = vunpack.c.l.b16 %v316
        %v537 = vunpack.c.l.b16 %v317
        %v538 = vunpack.c.l.b16 %v318
        %v539 = vunpack.c.l.b16 %v319
        %v540 = vunpack.c.l.b16 %v320
        %v541 = vunpack.c.l.b16 %v321
        %v542 = vunpack.c.l.b16 %v322
        %v543 = vunpack.c.l.b16 %v323
        %v544 = vunpack.c.l.b16 %v324
        %v545 = vunpack.c.l.b16 %v325
        %v546 = vunpack.c.l.b16 %v326
        %v547 = vunpack.c.l.b16 %v327
        %v548 = vunpack.c.l.b16 %v328
        %v549 = vunpack.c.l.b16 %v329
        %v550 = vunpack.c.l.b16 %v330
        %v551 = vunpack.c.l.b16 %v331
        %v552 = vunpack.c.l.b16 %v332
        %v553 = vunpack.c.l.b16 %v333
        %v554 = vunpack.c.l.b16 %v334
        %v555 = vunpack.c.l.b16 %v335
        %v556 = vunpack.c.l.b16 %v336
        %v557 = vunpack.c.l.b16 %v337
        %v558 = vunpack.c.l.b16 %v338
        %v559 = vunpack.c.l.b16 %v339
        %v560 = vunpack.c.l.b16 %v340
        %v561 = vunpack.c.l.b16 %v341
        %v562 = vunpack.c.l.b16 %v342
        %v563 = vunpack.c.l.b16 %v343
        %v564 = vunpack.c.l.b16 %v344
        %v565 = vunpack.c.l.b16 %v345
        %v566 = vunpack.c.l.b16 %v346
        %v567 = vunpack.c.l.b16 %v347
        %v568 = vunpack.c.l.b16 %v348
        %v569 = vunpack.c.l.b16 %v349
        %v570 = vunpack.c.l.b16 %v350
        %v571 = vunpack.c.l.b16 %v351
        %v572 = vunpack.c.l.b16 %v352
        %v573 = vunpack.c.l.b16 %v353
        %v574 = vunpack.c.l.b16 %v354
        %v575 = vunpack.c.l.b16 %v355
        %v576 = vunpack.c.l.b16 %v356
        %v577 = vunpack.c.l.b16 %v357
        %v578 = vunpack.c.l.b16 %v358
        %v579 = vunpack.c.l.b16 %v359
        %v580 = vunpack.c.l.b16 %v360
        %v581 = vunpack.c.l.b16 %v361
        %v582 = vunpack.c.l.b16 %v362
        %v583 = vunpack.c.l.b16 %v363
        %v584 = vunpack.c.l.b16 %v364
        %v585 = vunpack.c.l.b16 %v365
        %v586 = vunpack.c.l.b16 %v366
        %v587 = vunpack.c.l.b16 %v367
        %v588 = vunpack.c.l.b16 %v368
        %v589 = vunpack.c.l.b16 %v369
        %v590 = vpack.c.b16 %v495, %v494
        %v591 = vpack.c.b16 %v497, %v496
        %v592 = vpack.c.b16 %v499, %v498
        %v593 = vpack.c.b16 %v501, %v500
        %v594 = vpack.c.b16 %v503, %v502
        %v595 = vpack.c.b16 %v505, %v504
        %v596 = vpack.c.b16 %v507, %v506
        %v597 = vpack.c.b16 %v509, %v508
        %v598 = vpack.c.b16 %v511, %v510
        %v599 = vpack.c.b16 %v513, %v512
        %v600 = vpack.c.b16 %v515, %v514
        %v601 = vpack.c.b16 %v517, %v516
        %v602 = vpack.c.b16 %v519, %v518
        %v603 = vpack.c.b16 %v521, %v520
        %v604 = vpack.c.b16 %v523, %v522
        %v605 = vpack.c.b16 %v525, %v524
        %v606 = vpack.c.b16 %v527, %v526
        %v607 = vpack.c.b16 %v529, %v528
        %v608 = vpack.c.b16 %v531, %v530
        %v609 = vpack.c.b16 %v533, %v532
        %v610 = vpack.c.b16 %v535, %v534
        %v611 = vpack.c.b16 %v537, %v536
        %v612 = vpack.c.b16 %v539, %v538
        %v613 = vpack.c.b16 %v541, %v540
        %v614 = vpack.c.b16 %v543, %v542
        %v615 = vpack.c.b16 %v545, %v544
        %v616 = vpack.c.b16 %v547, %v546
        %v617 = vpack.c.b16 %v549, %v548
        %v618 = vpack.c.b16 %v551, %v550
        %v619 = vpack.c.b16 %v553, %v552
        %v620 = vpack.c.b16 %v555, %v554
        %v621 = vpack.c.b16 %v557, %v556
        %v622 = vpack.c.b16 %v559, %v558
        %v623 = vpack.c.b16 %v561, %v560
        %v624 = vpack.c.b16 %v563, %v562
        %v625 = vpack.c.b16 %v565, %v564
        %v626 = vpack.c.b16 %v567, %v566
        %v627 = vpack.c.b16 %v569, %v568
        %v628 = vpack.c.b16 %v571, %v570
        %v629 = vpack.c.b16 %v573, %v572
        %v630 = vpack.c.b16 %v575, %v574
        %v631 = vpack.c.b16 %v577, %v576
        %v632 = vpack.c.b16 %v579, %v578
        %v633 = vpack.c.b16 %v581, %v580
        %v634 = vpack.c.b16 %v583, %v582
        %v635 = vpack.c.b16 %v585, %v584
        %v636 = vpack.c.b16 %v587, %v586
        %v637 = vpack.c.b16 %v589, %v588
        %686 = vmatprep.subr.bf16.mxu0 0
        %687 = vmatpush1.bf16.msra.mxu0 %v590
        %688 = vmatprep.subr.bf16.mxu0 0
        %689 = vmatpush1.bf16.msra.mxu0 %v591
        %690 = vmatprep.subr.bf16.mxu0 0
        %691 = vmatpush1.bf16.msra.mxu0 %v592
        %692 = vmatprep.subr.bf16.mxu0 0
        %693 = vmatpush1.bf16.msra.mxu0 %v593
        %694 = vmatprep.subr.bf16.mxu0 0
        %695 = vmatpush1.bf16.msra.mxu0 %v594
        %696 = vmatprep.subr.bf16.mxu0 0
        %697 = vmatpush1.bf16.msra.mxu0 %v595
        %698 = vmatprep.subr.bf16.mxu0 0
        %699 = vmatpush1.bf16.msra.mxu0 %v596
        %700 = vmatprep.subr.bf16.mxu0 0
        %701 = vmatpush1.bf16.msra.mxu0 %v597
        %702 = vmatprep.subr.bf16.mxu0 0
        %703 = vmatpush1.bf16.msra.mxu0 %v598
        %704 = vmatprep.subr.bf16.mxu0 0
        %705 = vmatpush1.bf16.msra.mxu0 %v599
        %706 = vmatprep.subr.bf16.mxu0 0
        %707 = vmatpush1.bf16.msra.mxu0 %v600
        %708 = vmatprep.subr.bf16.mxu0 0
        %709 = vmatpush1.bf16.msra.mxu0 %v601
        %710 = vmatprep.subr.bf16.mxu0 0
        %711 = vmatpush1.bf16.msra.mxu0 %v602
        %712 = vmatprep.subr.bf16.mxu0 0
        %713 = vmatpush1.bf16.msra.mxu0 %v603
        %714 = vmatprep.subr.bf16.mxu0 0
        %715 = vmatpush1.bf16.msra.mxu0 %v604
        %716 = vmatprep.subr.bf16.mxu0 0
        %717 = vmatpush1.bf16.msra.mxu0 %v605
        %718 = vmatprep.mubr.bf16.mxu0 %v387
        %719 = vmatmul.mubr.bf16.gmra.mrb[0].mxu0 %v386
        %v720 = vpop.f32.mrb[0].mxu0
        %v721 = vadd.f32 %v375, %v720
        %v722 = vpop.f32.mrb[0].mxu0
        %v723 = vpop.f32.mrb[0].mxu0
        %v724 = vpop.f32.mrb[0].mxu0
        %725 = vdwg.mxu0
        %726 = vmatprep.subr.bf16.mxu0 0
        %727 = vmatpush1.bf16.msra.mxu0 %v606
        %728 = vmatprep.subr.bf16.mxu0 0
        %729 = vmatpush1.bf16.msra.mxu0 %v607
        %730 = vmatprep.subr.bf16.mxu0 0
        %731 = vmatpush1.bf16.msra.mxu0 %v608
        %732 = vmatprep.subr.bf16.mxu0 0
        %733 = vmatpush1.bf16.msra.mxu0 %v609
        %734 = vmatprep.subr.bf16.mxu0 0
        %735 = vmatpush1.bf16.msra.mxu0 %v610
        %736 = vmatprep.subr.bf16.mxu0 0
        %737 = vmatpush1.bf16.msra.mxu0 %v611
        %738 = vmatprep.subr.bf16.mxu0 0
        %739 = vmatpush1.bf16.msra.mxu0 %v612
        %740 = vmatprep.subr.bf16.mxu0 0
        %741 = vmatpush1.bf16.msra.mxu0 %v613
        %742 = vmatprep.subr.bf16.mxu0 0
        %743 = vmatpush1.bf16.msra.mxu0 %v614
        %744 = vmatprep.subr.bf16.mxu0 0
        %745 = vmatpush1.bf16.msra.mxu0 %v615
        %746 = vmatprep.subr.bf16.mxu0 0
        %747 = vmatpush1.bf16.msra.mxu0 %v616
        %748 = vmatprep.subr.bf16.mxu0 0
        %749 = vmatpush1.bf16.msra.mxu0 %v617
        %750 = vmatprep.subr.bf16.mxu0 0
        %751 = vmatpush1.bf16.msra.mxu0 %v618
        %752 = vmatprep.subr.bf16.mxu0 0
        %753 = vmatpush1.bf16.msra.mxu0 %v619
        %754 = vmatprep.subr.bf16.mxu0 0
        %755 = vmatpush1.bf16.msra.mxu0 %v620
        %756 = vmatprep.subr.bf16.mxu0 0
        %757 = vmatpush1.bf16.msra.mxu0 %v621
        %758 = vmatprep.mubr.bf16.mxu0 %v389
        %759 = vmatmul.mubr.bf16.gmra.mrb[0].mxu0 %v388
        %v760 = vpop.f32.mrb[0].mxu0
        %v761 = vadd.f32 %v721, %v760
        %v762 = vpop.f32.mrb[0].mxu0
        %v763 = vpop.f32.mrb[0].mxu0
        %v764 = vpop.f32.mrb[0].mxu0
        %765 = vdwg.mxu0
        %766 = vmatprep.subr.bf16.mxu0 0
        %767 = vmatpush1.bf16.msra.mxu0 %v622
        %768 = vmatprep.subr.bf16.mxu0 0
        %769 = vmatpush1.bf16.msra.mxu0 %v623
        %770 = vmatprep.subr.bf16.mxu0 0
        %771 = vmatpush1.bf16.msra.mxu0 %v624
        %772 = vmatprep.subr.bf16.mxu0 0
        %773 = vmatpush1.bf16.msra.mxu0 %v625
        %774 = vmatprep.subr.bf16.mxu0 0
        %775 = vmatpush1.bf16.msra.mxu0 %v626
        %776 = vmatprep.subr.bf16.mxu0 0
        %777 = vmatpush1.bf16.msra.mxu0 %v627
        %778 = vmatprep.subr.bf16.mxu0 0
        %779 = vmatpush1.bf16.msra.mxu0 %v628
        %780 = vmatprep.subr.bf16.mxu0 0
        %781 = vmatpush1.bf16.msra.mxu0 %v629
        %782 = vmatprep.subr.bf16.mxu0 0
        %783 = vmatpush1.bf16.msra.mxu0 %v630
        %784 = vmatprep.subr.bf16.mxu0 0
        %785 = vmatpush1.bf16.msra.mxu0 %v631
        %786 = vmatprep.subr.bf16.mxu0 0
        %787 = vmatpush1.bf16.msra.mxu0 %v632
        %788 = vmatprep.subr.bf16.mxu0 0
        %789 = vmatpush1.bf16.msra.mxu0 %v633
        %790 = vmatprep.subr.bf16.mxu0 0
        %791 = vmatpush1.bf16.msra.mxu0 %v634
        %792 = vmatprep.subr.bf16.mxu0 0
        %793 = vmatpush1.bf16.msra.mxu0 %v635
        %794 = vmatprep.subr.bf16.mxu0 0
        %795 = vmatpush1.bf16.msra.mxu0 %v636
        %796 = vmatprep.subr.bf16.mxu0 0
        %797 = vmatpush1.bf16.msra.mxu0 %v637
        %798 = vmatprep.mubr.bf16.mxu0 %v391
        %799 = vmatmul.mubr.bf16.gmra.mrb[0].mxu0 %v390
        %v800 = vpop.f32.mrb[0].mxu0
        %v801 = vadd.f32 %v761, %v800
        %v802 = vpop.f32.mrb[0].mxu0
        %v803 = vpop.f32.mrb[0].mxu0
        %v804 = vpop.f32.mrb[0].mxu0
        %805 = vdwg.mxu0
        %v806 = vmul.f32 %v801, 0.5
        %v807 = vmul.f32 %v801, 0.70710677
        %v808 = verf.f32.pop %v807
        %v809 = vadd.f32 %v808, 1.0
        %v810 = vmul.f32 %v806, %v809
        %v811 = vpack.c.bf16 %v810, %v810
        %v812 = vld [vmem:[#allocation6] sm:$0xf]
        %v813 = vld [vmem:[#allocation6 + $0x4] sm:$0xf]
        %v814 = vld [vmem:[#allocation6 + $0x8] sm:$0xf]
        %v815 = vld [vmem:[#allocation6 + $0xc] sm:$0xf]
        %v816 = vld [vmem:[#allocation6 + $0x10] sm:$0xf]
        %v817 = vld [vmem:[#allocation6 + $0x14] sm:$0xf]
        %v818 = vld [vmem:[#allocation6 + $0x18] sm:$0xf]
        %v819 = vld [vmem:[#allocation6 + $0x1c] sm:$0xf]
        %v820 = vld [vmem:[#allocation6 + $0x20] sm:$0xf]
        %v821 = vld [vmem:[#allocation6 + $0x24] sm:$0xf]
        %v822 = vld [vmem:[#allocation6 + $0x28] sm:$0xf]
        %v823 = vld [vmem:[#allocation6 + $0x2c] sm:$0xf]
        %v824 = vld [vmem:[#allocation6 + $0x30] sm:$0xf]
        %v825 = vld [vmem:[#allocation6 + $0x34] sm:$0xf]
        %v826 = vld [vmem:[#allocation6 + $0x38] sm:$0xf]
        %v827 = vld [vmem:[#allocation6 + $0x3c] sm:$0xf]
        %v828 = vld [vmem:[%s4] sm:$0x1]
        %v830 = vlaneseq
        %v831 = vshrl.u32 %v830, 7
        %v832 = vsub.s32 0, %v831
        %v833 = vrot.slane %v828, %v832
        %v851 = vunpack.c.l.b16 %v812
        %v852 = vunpack.c.l.b16 %v813
        %v853 = vunpack.c.l.b16 %v814
        %v854 = vunpack.c.l.b16 %v815
        %v855 = vunpack.c.l.b16 %v816
        %v856 = vunpack.c.l.b16 %v817
        %v857 = vunpack.c.l.b16 %v818
        %v858 = vunpack.c.l.b16 %v819
        %v859 = vunpack.c.l.b16 %v820
        %v860 = vunpack.c.l.b16 %v821
        %v861 = vunpack.c.l.b16 %v822
        %v862 = vunpack.c.l.b16 %v823
        %v863 = vunpack.c.l.b16 %v824
        %v864 = vunpack.c.l.b16 %v825
        %v865 = vunpack.c.l.b16 %v826
        %v866 = vunpack.c.l.b16 %v827
        %v867 = vpack.c.b16 %v852, %v851
        %v868 = vpack.c.b16 %v854, %v853
        %v869 = vpack.c.b16 %v856, %v855
        %v870 = vpack.c.b16 %v858, %v857
        %v871 = vpack.c.b16 %v860, %v859
        %v872 = vpack.c.b16 %v862, %v861
        %v873 = vpack.c.b16 %v864, %v863
        %v874 = vpack.c.b16 %v866, %v865
        %883 = vmatprep.subr.bf16.mxu0 0
        %884 = vmatpush1.bf16.msra.mxu0 %v867
        %885 = vmatprep.subr.bf16.mxu0 0
        %886 = vmatpush1.bf16.msra.mxu0 %v868
        %887 = vmatprep.subr.bf16.mxu0 0
        %888 = vmatpush1.bf16.msra.mxu0 %v869
        %889 = vmatprep.subr.bf16.mxu0 0
        %890 = vmatpush1.bf16.msra.mxu0 %v870
        %891 = vmatprep.subr.bf16.mxu0 0
        %892 = vmatpush1.bf16.msra.mxu0 %v871
        %893 = vmatprep.subr.bf16.mxu0 0
        %894 = vmatpush1.bf16.msra.mxu0 %v872
        %895 = vmatprep.subr.bf16.mxu0 0
        %896 = vmatpush1.bf16.msra.mxu0 %v873
        %897 = vmatprep.subr.bf16.mxu0 0
        %898 = vmatpush1.bf16.msra.mxu0 %v874
        %899 = vmatprep.subr.bf16.mxu0 0
        %900 = vmatpush1.bf16.msra.mxu0 0
        %901 = vmatprep.subr.bf16.mxu0 0
        %902 = vmatpush1.bf16.msra.mxu0 0
        %903 = vmatprep.subr.bf16.mxu0 0
        %904 = vmatpush1.bf16.msra.mxu0 0
        %905 = vmatprep.subr.bf16.mxu0 0
        %906 = vmatpush1.bf16.msra.mxu0 0
        %907 = vmatprep.subr.bf16.mxu0 0
        %908 = vmatpush1.bf16.msra.mxu0 0
        %909 = vmatprep.subr.bf16.mxu0 0
        %910 = vmatpush1.bf16.msra.mxu0 0
        %911 = vmatprep.subr.bf16.mxu0 0
        %912 = vmatpush1.bf16.msra.mxu0 0
        %913 = vmatprep.subr.bf16.mxu0 0
        %914 = vmatpush1.bf16.msra.mxu0 0
        %915 = vmatprep.mubr.bf16.mxu0 0
        %916 = vmatmul.mubr.bf16.gmra.mrb[0].mxu0 %v811
        %v917 = vpop.f32.mrb[0].mxu0
        %v918 = vadd.f32 %v833, %v917
        %v919 = vpop.f32.mrb[0].mxu0
        %v920 = vpop.f32.mrb[0].mxu0
        %v921 = vpop.f32.mrb[0].mxu0
        %922 = vdwg.mxu0
        %v923 = vpack.c.bf16 %v918, %v918
        %924 = vst [vmem:[%s269] sm:$0xf] %v923
        %p925 = scmp.lt.s32.totalorder %s20, 1
        %s926 = scalar_select %p925, %s20, 1
        %s927 = smul.addr %s926, 4
        %s928 = scalar_lea.vmem %s5, %s927
        // Predicated region
        $region53: #{text_encoder_head.1} parent=39 // pred_check
          %p929 = pneg %p148
        $region54: #{text_encoder_head.1} parent=39 // pred_check_branch
          %931 = sbr.rel (%p929) target = $region56
        $region55: #{text_encoder_head.1} parent=39 // pred_region
          _
        $region56: #{text_encoder_head.1} parent=39 // pred_fallthru
          _
      $region40: #{text_encoder_head.1} parent=5 // pred_fallthru
        _
      %p932 = scmp.le.s32.totalorder 2, %s15
      // Predicated region
      $region57: #{text_encoder_head.1} parent=5 // pred_check
        %p933 = pneg %p932
      $region58: #{text_encoder_head.1} parent=5 // pred_check_branch
        %935 = sbr.rel (%p933) target = $region60
      $region59: #{text_encoder_head.1} parent=5 // pred_region
        %s936 = ssub.s32 %s15, 2
        // Predicated region
        $region61: #{text_encoder_head.1} parent=59 // pred_check
          %p937 = pneg %p154
        $region62: #{text_encoder_head.1} parent=59 // pred_check_branch
          %939 = sbr.rel (%p937) target = $region64
        $region63: #{text_encoder_head.1} parent=59 // pred_region
          %p940 = scmp.lt.s32.totalorder %s21, 1
          %s941 = scalar_select %p940, %s21, 1
          %s942 = smul.addr %s941, 4
          %s943 = scalar_lea.vmem %s5, %s942
        $region64: #{text_encoder_head.1} parent=59 // pred_fallthru
          _
      $region60: #{text_encoder_head.1} parent=5 // pred_fallthru
        _
    $region6: #{text_encoder_head.1} parent=1 // loop_footer
      %s19 = sadd.s32 1, %s15
    $region7: #{text_encoder_head.1} parent=1 // loop_footer_branch
      %14 = sbr.rel target = $region3
    $region8: #{text_encoder_head.1} parent=1 // loop_exit
      _
    %944 = vsyncpa [#allocation3], 1
    %s945 = scalar_lea.sflag [#allocation3], 1
    %946 = vsyncpa %s945, 1
    %947 = vsyncpa [#allocation5], 1

</llo_original>
